<compile_context>
chip_gen: v6e
topology: v6e:2x2x1
jax: 0.10.0
libtpu: 0.0.40
codegen_flags: <defaults>
</compile_context>

<pallas_src>
import functools

import jax
import jax.numpy as jnp
from jax.experimental import pallas as pl
from jax.experimental.pallas import tpu as pltpu


def _round_up(n: int, m: int) -> int:
    return ((n + m - 1) // m) * m


_TB_CAP = 2048  # ~2-3 MiB peak VMEM incl. intermediates; safe on v5e/v6e/v7x


def _pick_tb(b: int) -> int:
    """Batch tile.  Ragged grids are fine (pl.cdiv + masked last block)."""
    if b <= _TB_CAP:
        if b >= 256:
            # Keep >= 2 grid steps so v7x megacore has something to shard,
            # while staying 8-row (sublane) aligned for the non-final blocks.
            return _round_up(pl.cdiv(b, 2), 8)
        return b  # single full-dim block (legal for any b, incl. b % 8 != 0)
    return _TB_CAP


def _smcl_kernel(x_ref, vec_ref, w_ref, out_ref, *, p: int, two_k: int,
                 restrict_to_square: bool):
    # vec slab rows: 0=w1, 1=b1, 2=b2, 3=b3 (each lane-padded to P with zeros).
    x = x_ref[...]                              # [TB, 1]
    w1 = vec_ref[0:1, :]                        # [1, P]
    b1 = vec_ref[1:2, :]
    b2 = vec_ref[2:3, :]
    b3 = vec_ref[3:4, :]

    # fc1: contraction dim is 1 -> just a broadcast scale; keep it on the VPU.
    h = jnp.maximum(x * w1 + b1, 0.0)           # [TB, P]

    # fc2 + relu (MXU, f32 accumulate). Zero-padded rows/cols contribute 0.
    h = jnp.maximum(
        jnp.dot(h, w_ref[0:p, :], preferred_element_type=jnp.float32) + b2,
        0.0)

    # All K hypothesis heads packed into one matmul (MXU), then keep the
    # 2K useful columns only (padded columns are exactly zero anyway).
    y = jnp.dot(h, w_ref[p:2 * p, :], preferred_element_type=jnp.float32) + b3
    y = y[:, :two_k]                            # [TB, 2K]
    if restrict_to_square:
        y = jnp.tanh(y)

    out_ref[...] = y                            # [TB, 2K] store (true width)


def pack_params(params, num_hypothesis: int):
    """Pack the 6 small parameter tensors into 2 padded slabs (done once)."""
    H = params["w1"].shape[1]
    K = num_hypothesis
    P = max(_round_up(H, 128), _round_up(2 * K, 128))

    def pad_row(v):
        v = v.reshape(-1).astype(jnp.float32)
        return jnp.zeros((1, P), jnp.float32).at[0, :v.shape[0]].set(v)

    vec = jnp.concatenate(
        [pad_row(params["w1"]), pad_row(params["b1"]),
         pad_row(params["b2"]), pad_row(params["b3"]),
         jnp.zeros((4, P), jnp.float32)],        # sublane pad to 8 rows
        axis=0)                                  # [8, P]

    def pad_mat(m):
        m = m.astype(jnp.float32)
        return jnp.zeros((P, P), jnp.float32).at[:m.shape[0], :m.shape[1]].set(m)

    w = jnp.concatenate([pad_mat(params["w2"]), pad_mat(params["w3"])],
                        axis=0)                  # [2P, P]
    return vec, w


def smcl_forward(x, vec, w, *, num_hypothesis: int, num_hidden_units: int,
                 restrict_to_square: bool):
    """Pallas implementation of Smcl.forward.

    Args:
      x:   [B, 1] float32 input.
      vec: [8, P] packed w1/b1/b2/b3 slab (from pack_params).
      w:   [2P, P] packed w2/w3 slab (from pack_params).
    Returns:
      hyp_stacked: [B, K, 2], confs: [B, K, 1]
    """
    B = x.shape[0]
    K = num_hypothesis
    H = num_hidden_units
    P = w.shape[1]
    TB = _pick_tb(B)
    grid = (pl.cdiv(B, TB),)

    # Useful (unpadded) work, not the P=128-padded work.
    flops = 2 * B * (H + H * H + H * 2 * K)
    transcendentals = B * 2 * K if restrict_to_square else 0
    bytes_accessed = 4 * (B * 1 + (3 * H + 2 * K) + (H * H + H * 2 * K)
                          + B * 2 * K)

    kernel = functools.partial(_smcl_kernel, p=P, two_k=2 * K,
                               restrict_to_square=restrict_to_square)

    y = pl.pallas_call(
        kernel,
        out_shape=jax.ShapeDtypeStruct((B, 2 * K), jnp.float32),
        grid=grid,
        in_specs=[
            pl.BlockSpec((TB, 1), lambda i: (i, 0)),        # batch tile of x
            pl.BlockSpec((8, P), lambda i: (0, 0)),         # resident vec slab
            pl.BlockSpec((2 * P, P), lambda i: (0, 0)),     # resident weights
        ],
        out_specs=pl.BlockSpec((TB, 2 * K), lambda i: (i, 0)),
        compiler_params=pltpu.CompilerParams(
            dimension_semantics=("parallel",)),             # megacore on v7x
        cost_estimate=pl.CostEstimate(
            flops=flops, transcendentals=transcendentals,
            bytes_accessed=bytes_accessed),
    )(x, vec, w)

    hyp_stacked = y.reshape(B, K, 2)             # metadata-only reshape
    confs = jnp.ones((B, K, 1), dtype=hyp_stacked.dtype)
    return hyp_stacked, confs


def init_params(key, num_hidden_units: int, num_hypothesis: int):
    """Deterministic init mirroring nn.Linear default (U(-1/sqrt(fan_in), +))."""
    H, K = num_hidden_units, num_hypothesis
    k1, k2, k3, k4, k5, k6 = jax.random.split(key, 6)

    def unif(k, shape, fan_in):
        bound = 1.0 / jnp.sqrt(jnp.asarray(fan_in, jnp.float32))
        return jax.random.uniform(k, shape, jnp.float32, -bound, bound)

    # Stored already transposed relative to PyTorch (so y = x @ W + b).
    return {
        "w1": unif(k1, (1, H), 1),
        "b1": unif(k2, (H,), 1),
        "w2": unif(k3, (H, H), H),
        "b2": unif(k4, (H,), H),
        "w3": unif(k5, (H, 2 * K), H),   # K heads packed along output axis
        "b3": unif(k6, (2 * K,), H),
    }


def _reference(x, params, num_hypothesis, restrict_to_square):
    # fc1 has contraction dim 1: x @ w1 == x * w1 (exact, no matmul rounding).
    h = jnp.maximum(x * params["w1"] + params["b1"], 0.0)
    h = jnp.maximum(jnp.dot(h, params["w2"]) + params["b2"], 0.0)
    y = jnp.dot(h, params["w3"]) + params["b3"]
    if restrict_to_square:
        y = jnp.tanh(y)
    return y.reshape(x.shape[0], num_hypothesis, 2)


if __name__ == "__main__":
    H = 32           # num_hidden_units
    K = 4            # num_hypothesis
    RESTRICT = True  # restrict_to_square

    key = jax.random.PRNGKey(0)
    kx, kp, kx2 = jax.random.split(key, 3)
    params = init_params(kp, H, K)
    vec, w = pack_params(params, K)

    fwd = jax.jit(functools.partial(smcl_forward, num_hypothesis=K,
                                    num_hidden_units=H,
                                    restrict_to_square=RESTRICT))

    # Primary small-shape run (matches the module's scale): B = 8.
    B = 8
    x = jax.random.normal(kx, (B, 1), dtype=jnp.float32)
    hyp, confs = fwd(x, vec, w)
    hyp = jax.block_until_ready(hyp)
    confs = jax.block_until_ready(confs)

    assert hyp.shape == (B, K, 2), hyp.shape
    assert confs.shape == (B, K, 1), confs.shape
    ref = _reference(x, params, K, RESTRICT)
    assert jnp.allclose(hyp, ref, atol=1e-5, rtol=1e-5)
    assert jnp.all(confs == 1.0)

    # Secondary check: ragged multi-step grid (exercises the cdiv/masked path
    # and the >=2-step megacore split that the review flagged as untested).
    B2 = 300
    x2 = jax.random.normal(kx2, (B2, 1), dtype=jnp.float32)
    hyp2, confs2 = fwd(x2, vec, w)
    hyp2 = jax.block_until_ready(hyp2)
    ref2 = _reference(x2, params, K, RESTRICT)
    assert hyp2.shape == (B2, K, 2), hyp2.shape
    assert jnp.allclose(hyp2, ref2, atol=1e-5, rtol=1e-5)
    assert jnp.all(confs2 == 1.0)

    print("KERNEL_OK")
</pallas_src>

<mosaic_0001>
module attributes {stable_mosaic.version = 11 : i64} {
  func.func @_smcl_kernel(%arg0: i32, %arg1: memref<8x1xf32, #tpu.memory_space<vmem>>, %arg2: memref<8x128xf32, #tpu.memory_space<vmem>>, %arg3: memref<256x128xf32, #tpu.memory_space<vmem>>, %arg4: memref<8x8xf32, #tpu.memory_space<vmem>>) attributes {dimension_semantics = [#tpu.dimension_semantics<parallel>], iteration_bounds = array<i64: 1>, scalar_prefetch = 0 : i64, scratch_operands = 0 : i64, tpu.core_type = #tpu.core_type<tc>, window_params = [{transform_indices = @transform_0, window_bounds = array<i64: 8, 1>}, {pipeline_mode = #tpu.pipeline_mode<synchronous>, transform_indices = @transform_1, window_bounds = array<i64: 8, 128>}, {pipeline_mode = #tpu.pipeline_mode<synchronous>, transform_indices = @transform_2, window_bounds = array<i64: 256, 128>}, {transform_indices = @transform_3, window_bounds = array<i64: 8, 8>}]} {
    %c0 = arith.constant 0 : index
    %c0_0 = arith.constant 0 : index
    %0 = vector.load %arg1[%c0, %c0_0] : memref<8x1xf32, #tpu.memory_space<vmem>>, vector<8x1xf32>
    %c0_1 = arith.constant 0 : index
    %c0_2 = arith.constant 0 : index
    %1 = vector.load %arg2[%c0_1, %c0_2] : memref<8x128xf32, #tpu.memory_space<vmem>>, vector<1x128xf32>
    %c1 = arith.constant 1 : index
    %c0_3 = arith.constant 0 : index
    %2 = vector.load %arg2[%c1, %c0_3] : memref<8x128xf32, #tpu.memory_space<vmem>>, vector<1x128xf32>
    %c2 = arith.constant 2 : index
    %c0_4 = arith.constant 0 : index
    %3 = vector.load %arg2[%c2, %c0_4] : memref<8x128xf32, #tpu.memory_space<vmem>>, vector<1x128xf32>
    %c3 = arith.constant 3 : index
    %c0_5 = arith.constant 0 : index
    %4 = vector.load %arg2[%c3, %c0_5] : memref<8x128xf32, #tpu.memory_space<vmem>>, vector<1x128xf32>
    %5 = vector.broadcast %0 : vector<8x1xf32> to vector<8x128xf32>
    %6 = vector.broadcast %1 : vector<1x128xf32> to vector<8x128xf32>
    %7 = arith.mulf %5, %6 : vector<8x128xf32>
    %8 = vector.broadcast %2 : vector<1x128xf32> to vector<8x128xf32>
    %9 = arith.addf %7, %8 : vector<8x128xf32>
    %cst = arith.constant 0.000000e+00 : f32
    %10 = vector.broadcast %cst : f32 to vector<8x128xf32>
    %11 = arith.maximumf %9, %10 : vector<8x128xf32>
    %c0_6 = arith.constant 0 : index
    %c0_7 = arith.constant 0 : index
    %12 = vector.load %arg3[%c0_6, %c0_7] : memref<256x128xf32, #tpu.memory_space<vmem>>, vector<128x128xf32>
    %cst_8 = arith.constant dense<0.000000e+00> : vector<8x128xf32>
    %13 = tpu.matmul %11, %12, %cst_8 {dimension_numbers = #tpu.dot_dimension_numbers<[1], [0], [0], [1], [0, 0, 1, 1], [], []>} : vector<8x128xf32>, vector<128x128xf32>, vector<8x128xf32> -> vector<8x128xf32>
    %14 = vector.broadcast %3 : vector<1x128xf32> to vector<8x128xf32>
    %15 = arith.addf %13, %14 : vector<8x128xf32>
    %cst_9 = arith.constant 0.000000e+00 : f32
    %16 = vector.broadcast %cst_9 : f32 to vector<8x128xf32>
    %17 = arith.maximumf %15, %16 : vector<8x128xf32>
    %c128 = arith.constant 128 : index
    %c0_10 = arith.constant 0 : index
    %18 = vector.load %arg3[%c128, %c0_10] : memref<256x128xf32, #tpu.memory_space<vmem>>, vector<128x128xf32>
    %cst_11 = arith.constant dense<0.000000e+00> : vector<8x128xf32>
    %19 = tpu.matmul %17, %18, %cst_11 {dimension_numbers = #tpu.dot_dimension_numbers<[1], [0], [0], [1], [0, 0, 1, 1], [], []>} : vector<8x128xf32>, vector<128x128xf32>, vector<8x128xf32> -> vector<8x128xf32>
    %20 = vector.broadcast %4 : vector<1x128xf32> to vector<8x128xf32>
    %21 = arith.addf %19, %20 : vector<8x128xf32>
    %22 = vector.extract_strided_slice %21 {offsets = [0, 0], sizes = [8, 8], strides = [1, 1]} : vector<8x128xf32> to vector<8x8xf32>
    %23 = math.tanh %22 : vector<8x8xf32>
    %c0_12 = arith.constant 0 : index
    %c0_13 = arith.constant 0 : index
    %24 = vector.load %arg4[%c0_12, %c0_13] : memref<8x8xf32, #tpu.memory_space<vmem>>, vector<8x8xf32>
    tpu.vector_store %arg4[%c0_12, %c0_13], %23 {strides = array<i32>} : memref<8x8xf32, #tpu.memory_space<vmem>>, vector<8x8xf32>,
    return
  }
  func.func @transform_0(%arg0: i32) -> (i32, i32) {
    %c0_i32 = arith.constant 0 : i32
    %c0_i32_0 = arith.constant 0 : i32
    return %arg0, %c0_i32 : i32, i32
  }
  func.func @transform_1(%arg0: i32) -> (i32, i32) {
    %c0_i32 = arith.constant 0 : i32
    %c0_i32_0 = arith.constant 0 : i32
    %c0_i32_1 = arith.constant 0 : i32
    return %c0_i32, %c0_i32_0 : i32, i32
  }
  func.func @transform_2(%arg0: i32) -> (i32, i32) {
    %c0_i32 = arith.constant 0 : i32
    %c0_i32_0 = arith.constant 0 : i32
    %c0_i32_1 = arith.constant 0 : i32
    return %c0_i32, %c0_i32_0 : i32, i32
  }
  func.func @transform_3(%arg0: i32) -> (i32, i32) {
    %c0_i32 = arith.constant 0 : i32
    %c0_i32_0 = arith.constant 0 : i32
    return %arg0, %c0_i32 : i32, i32
  }
}

</mosaic_0001>

<llo_original>
// kernel: smcl_forward.1
$region0: #{smcl_forward.1}
  #allocation0 [shape = 'u32[]', space=smem, size = 0x4, offset = 0x4, fixed_abs, tag = 'smem constant byte address 0x4 - core index']
  #allocation1 [shape = 'u32[144,128]{1,0:T(1,128)}', space=vmem, size = 0x12000, scoped, tag = 'internal scratch']
  %s0 = inlined_call_operand.vmem [shape: f32[8,1], index: 0, kind: input, shape index: {}]
  %s1 = inlined_call_operand.vmem [shape: f32[8,128], index: 1, kind: input, shape index: {}]
  %s2 = inlined_call_operand.hbm [shape: f32[256,128], index: 2, kind: input, shape index: {}]
  %s3 = inlined_call_operand.vmem [shape: f32[8,8], index: 3, kind: output, shape index: {}]
  %s4 = sld [smem:[#allocation0]]
  $region26: #{smcl_forward.1} parent=0
    _
  %s6 = ssub.s32 1, %s4
  %s7 = scalar_select 0, %s6, %s4
  $region1: #{smcl_forward.1} parent=0
    #allocation2 [shape = 'u8[131072]{0}', space=vmem, size = 0x20000, scoped, tag = 'input window, operand 2, single buffered']
    #allocation3 [shape = 's32[1]{0}', space=sflag, size = 0x4, scoped, tag = 'scoped memory for smcl_forward.1']
    %8 = vsyncpa [#allocation3], 0
    // Predicated region
    $region2: #{smcl_forward.1} parent=1 // pred_check
      _
    $region3: #{smcl_forward.1} parent=1 // pred_check_branch
      %10 = sbr.rel (0) target = $region5
    $region4: #{smcl_forward.1} parent=1 // pred_region
      _
    $region5: #{smcl_forward.1} parent=1 // pred_fallthru
      _
    // Predicated region
    $region6: #{smcl_forward.1} parent=1 // pred_check
      _
    $region7: #{smcl_forward.1} parent=1 // pred_check_branch
      %12 = sbr.rel (0) target = $region9
    $region8: #{smcl_forward.1} parent=1 // pred_region
      _
    $region9: #{smcl_forward.1} parent=1 // pred_fallthru
      _
    // Predicated region
    $region10: #{smcl_forward.1} parent=1 // pred_check
      _
    $region11: #{smcl_forward.1} parent=1 // pred_check_branch
      %14 = sbr.rel (0) target = $region13
    $region12: #{smcl_forward.1} parent=1 // pred_region
      %s16 = ssub.s32 4096, 4096
      %17 = vsyncadd [#allocation3], %s16
      %s18 = sshll.u32 [#allocation2], 4
      %s19 = int_to_ptr.vmem [resolvable:$true] %s18
      %24 = dma.hbm_to_vmem [thread:$0]  %s2, 4096, %s19, [#allocation3], 128, 128, 8
    $region13: #{smcl_forward.1} parent=1 // pred_fallthru
      _
    // Predicated region
    $region14: #{smcl_forward.1} parent=1 // pred_check
      _
    $region15: #{smcl_forward.1} parent=1 // pred_check_branch
      %26 = sbr.rel (0) target = $region17
    $region16: #{smcl_forward.1} parent=1 // pred_region
      %27 = dma.done [#allocation3], 4096
    $region17: #{smcl_forward.1} parent=1 // pred_fallthru
      _
    %v28 = vld [vmem:[%s0] sm:$0xff]
    %v29 = vld [vmem:[%s1] sm:$0x1]
    %v30 = vld [vmem:[%s1 + $0x1] sm:$0x1]
    %v31 = vld [vmem:[%s1 + $0x2] sm:$0x1]
    %v32 = vld [vmem:[%s1 + $0x3] sm:$0x1]
    %34 = vset.pattern.permute.xlu0 0
    %35 = vperm.xlu0 %34, %v28
    %v36 = vpop.permute.xlu0 %35
    %v38 = vlaneseq
    %v39 = vshrl.u32 %v38, 7
    %v40 = vsub.s32 0, %v39
    %v41 = vrot.slane %v29, %v40
    %v42 = vmul.f32 %v36, %v41
    %v43 = vlaneseq
    %v44 = vshrl.u32 %v43, 7
    %v45 = vsub.s32 0, %v44
    %v46 = vrot.slane %v30, %v45
    %v47 = vadd.f32 %v42, %v46
    %v48 = vmax.f32 %v47, 0.0
    %v49 = vld [vmem:[#allocation2] sm:$0xff]
    %v50 = vld [vmem:[#allocation2 + $0x8] sm:$0xff]
    %v51 = vld [vmem:[#allocation2 + $0x10] sm:$0xff]
    %v52 = vld [vmem:[#allocation2 + $0x18] sm:$0xff]
    %v53 = vld [vmem:[#allocation2 + $0x20] sm:$0xff]
    %v54 = vld [vmem:[#allocation2 + $0x28] sm:$0xff]
    %v55 = vld [vmem:[#allocation2 + $0x30] sm:$0xff]
    %v56 = vld [vmem:[#allocation2 + $0x38] sm:$0xff]
    %v57 = vld [vmem:[#allocation2 + $0x40] sm:$0xff]
    %v58 = vld [vmem:[#allocation2 + $0x48] sm:$0xff]
    %v59 = vld [vmem:[#allocation2 + $0x50] sm:$0xff]
    %v60 = vld [vmem:[#allocation2 + $0x58] sm:$0xff]
    %v61 = vld [vmem:[#allocation2 + $0x60] sm:$0xff]
    %v62 = vld [vmem:[#allocation2 + $0x68] sm:$0xff]
    %v63 = vld [vmem:[#allocation2 + $0x70] sm:$0xff]
    %v64 = vld [vmem:[#allocation2 + $0x78] sm:$0xff]
    %v65 = vlaneseq
    %v66 = vshrl.u32 %v65, 7
    %v67 = vsub.s32 0, %v66
    %v68 = vrot.slane %v31, %v67
    %69 = vmatprep.subr.mxu0 0.0
    %70 = vmatpush1.msra.mxu0 %v64
    %71 = vmatprep.subr.mxu0 0.0
    %72 = vmatpush1.msra.mxu0 %v63
    %73 = vmatprep.subr.mxu0 0.0
    %74 = vmatpush1.msra.mxu0 %v62
    %75 = vmatprep.subr.mxu0 0.0
    %76 = vmatpush1.msra.mxu0 %v61
    %77 = vmatprep.subr.mxu0 0.0
    %78 = vmatpush1.msra.mxu0 %v60
    %79 = vmatprep.subr.mxu0 0.0
    %80 = vmatpush1.msra.mxu0 %v59
    %81 = vmatprep.subr.mxu0 0.0
    %82 = vmatpush1.msra.mxu0 %v58
    %83 = vmatprep.subr.mxu0 0.0
    %84 = vmatpush1.msra.mxu0 %v57
    %85 = vmatprep.subr.mxu0 0.0
    %86 = vmatpush1.msra.mxu0 %v56
    %87 = vmatprep.subr.mxu0 0.0
    %88 = vmatpush1.msra.mxu0 %v55
    %89 = vmatprep.subr.mxu0 0.0
    %90 = vmatpush1.msra.mxu0 %v54
    %91 = vmatprep.subr.mxu0 0.0
    %92 = vmatpush1.msra.mxu0 %v53
    %93 = vmatprep.subr.mxu0 0.0
    %94 = vmatpush1.msra.mxu0 %v52
    %95 = vmatprep.subr.mxu0 0.0
    %96 = vmatpush1.msra.mxu0 %v51
    %97 = vmatprep.subr.mxu0 0.0
    %98 = vmatpush1.msra.mxu0 %v50
    %99 = vmatprep.subr.mxu0 0.0
    %100 = vmatpush1.msra.mxu0 %v49
    %101 = vmatprep.subr.mxu0 0.0
    %102 = vmatpush2.msra.mxu0 0.0
    %103 = vmatprep.subr.mxu0 0.0
    %104 = vmatpush2.msra.mxu0 0.0
    %105 = vmatprep.subr.mxu0 0.0
    %106 = vmatpush2.msra.mxu0 0.0
    %107 = vmatprep.subr.mxu0 0.0
    %108 = vmatpush2.msra.mxu0 0.0
    %109 = vmatprep.subr.mxu0 0.0
    %110 = vmatpush2.msra.mxu0 0.0
    %111 = vmatprep.subr.mxu0 0.0
    %112 = vmatpush2.msra.mxu0 0.0
    %113 = vmatprep.subr.mxu0 0.0
    %114 = vmatpush2.msra.mxu0 0.0
    %115 = vmatprep.subr.mxu0 0.0
    %116 = vmatpush2.msra.mxu0 0.0
    %117 = vmatprep.subr.mxu0 0.0
    %118 = vmatpush2.msra.mxu0 0.0
    %119 = vmatprep.subr.mxu0 0.0
    %120 = vmatpush2.msra.mxu0 0.0
    %121 = vmatprep.subr.mxu0 0.0
    %122 = vmatpush2.msra.mxu0 0.0
    %123 = vmatprep.subr.mxu0 0.0
    %124 = vmatpush2.msra.mxu0 0.0
    %125 = vmatprep.subr.mxu0 0.0
    %126 = vmatpush2.msra.mxu0 0.0
    %127 = vmatprep.subr.mxu0 0.0
    %128 = vmatpush2.msra.mxu0 0.0
    %129 = vmatprep.subr.mxu0 0.0
    %130 = vmatpush2.msra.mxu0 0.0
    %131 = vmatprep.subr.mxu0 0.0
    %132 = vmatpush2.msra.mxu0 0.0
    %133 = vmatprep.mubr.f32.mxu0 0.0
    %134 = vmatmul.mubr.f32.gmra.mxu0 %v48
    %v135 = vpop.f32.mrf.mxu0
    %v136 = vadd.f32 %v68, %v135
    %v137 = vpop.f32.mrf.mxu0
    %138 = vdwg.mxu0
    %v139 = vmax.f32 %v136, 0.0
    %v140 = vld [vmem:[#allocation2 + $0x80] sm:$0xff]
    %v141 = vld [vmem:[#allocation2 + $0x88] sm:$0xff]
    %v142 = vld [vmem:[#allocation2 + $0x90] sm:$0xff]
    %v143 = vld [vmem:[#allocation2 + $0x98] sm:$0xff]
    %v144 = vld [vmem:[#allocation2 + $0xa0] sm:$0xff]
    %v145 = vld [vmem:[#allocation2 + $0xa8] sm:$0xff]
    %v146 = vld [vmem:[#allocation2 + $0xb0] sm:$0xff]
    %v147 = vld [vmem:[#allocation2 + $0xb8] sm:$0xff]
    %v148 = vld [vmem:[#allocation2 + $0xc0] sm:$0xff]
    %v149 = vld [vmem:[#allocation2 + $0xc8] sm:$0xff]
    %v150 = vld [vmem:[#allocation2 + $0xd0] sm:$0xff]
    %v151 = vld [vmem:[#allocation2 + $0xd8] sm:$0xff]
    %v152 = vld [vmem:[#allocation2 + $0xe0] sm:$0xff]
    %v153 = vld [vmem:[#allocation2 + $0xe8] sm:$0xff]
    %v154 = vld [vmem:[#allocation2 + $0xf0] sm:$0xff]
    %v155 = vld [vmem:[#allocation2 + $0xf8] sm:$0xff]
    %v156 = vlaneseq
    %v157 = vshrl.u32 %v156, 7
    %v158 = vsub.s32 0, %v157
    %v159 = vrot.slane %v32, %v158
    %160 = vmatprep.subr.mxu0 0.0
    %161 = vmatpush1.msra.mxu0 %v155
    %162 = vmatprep.subr.mxu0 0.0
    %163 = vmatpush1.msra.mxu0 %v154
    %164 = vmatprep.subr.mxu0 0.0
    %165 = vmatpush1.msra.mxu0 %v153
    %166 = vmatprep.subr.mxu0 0.0
    %167 = vmatpush1.msra.mxu0 %v152
    %168 = vmatprep.subr.mxu0 0.0
    %169 = vmatpush1.msra.mxu0 %v151
    %170 = vmatprep.subr.mxu0 0.0
    %171 = vmatpush1.msra.mxu0 %v150
    %172 = vmatprep.subr.mxu0 0.0
    %173 = vmatpush1.msra.mxu0 %v149
    %174 = vmatprep.subr.mxu0 0.0
    %175 = vmatpush1.msra.mxu0 %v148
    %176 = vmatprep.subr.mxu0 0.0
    %177 = vmatpush1.msra.mxu0 %v147
    %178 = vmatprep.subr.mxu0 0.0
    %179 = vmatpush1.msra.mxu0 %v146
    %180 = vmatprep.subr.mxu0 0.0
    %181 = vmatpush1.msra.mxu0 %v145
    %182 = vmatprep.subr.mxu0 0.0
    %183 = vmatpush1.msra.mxu0 %v144
    %184 = vmatprep.subr.mxu0 0.0
    %185 = vmatpush1.msra.mxu0 %v143
    %186 = vmatprep.subr.mxu0 0.0
    %187 = vmatpush1.msra.mxu0 %v142
    %188 = vmatprep.subr.mxu0 0.0
    %189 = vmatpush1.msra.mxu0 %v141
    %190 = vmatprep.subr.mxu0 0.0
    %191 = vmatpush1.msra.mxu0 %v140
    %192 = vmatprep.subr.mxu0 0.0
    %193 = vmatpush2.msra.mxu0 0.0
    %194 = vmatprep.subr.mxu0 0.0
    %195 = vmatpush2.msra.mxu0 0.0
    %196 = vmatprep.subr.mxu0 0.0
    %197 = vmatpush2.msra.mxu0 0.0
    %198 = vmatprep.subr.mxu0 0.0
    %199 = vmatpush2.msra.mxu0 0.0
    %200 = vmatprep.subr.mxu0 0.0
    %201 = vmatpush2.msra.mxu0 0.0
    %202 = vmatprep.subr.mxu0 0.0
    %203 = vmatpush2.msra.mxu0 0.0
    %204 = vmatprep.subr.mxu0 0.0
    %205 = vmatpush2.msra.mxu0 0.0
    %206 = vmatprep.subr.mxu0 0.0
    %207 = vmatpush2.msra.mxu0 0.0
    %208 = vmatprep.subr.mxu0 0.0
    %209 = vmatpush2.msra.mxu0 0.0
    %210 = vmatprep.subr.mxu0 0.0
    %211 = vmatpush2.msra.mxu0 0.0
    %212 = vmatprep.subr.mxu0 0.0
    %213 = vmatpush2.msra.mxu0 0.0
    %214 = vmatprep.subr.mxu0 0.0
    %215 = vmatpush2.msra.mxu0 0.0
    %216 = vmatprep.subr.mxu0 0.0
    %217 = vmatpush2.msra.mxu0 0.0
    %218 = vmatprep.subr.mxu0 0.0
    %219 = vmatpush2.msra.mxu0 0.0
    %220 = vmatprep.subr.mxu0 0.0
    %221 = vmatpush2.msra.mxu0 0.0
    %222 = vmatprep.subr.mxu0 0.0
    %223 = vmatpush2.msra.mxu0 0.0
    %224 = vmatprep.mubr.f32.mxu0 0.0
    %225 = vmatmul.mubr.f32.gmra.mxu0 %v139
    %v226 = vpop.f32.mrf.mxu0
    %v227 = vadd.f32 %v159, %v226
    %v228 = vpop.f32.mrf.mxu0
    %229 = vdwg.mxu0
    %v230 = vtanh.pop %v227
    %vm231 = vcmask 64512
    %232 = vst.msk [vmem:[%s3] sm:$0xff] %vm231, %v230
    // Predicated region
    $region18: #{smcl_forward.1} parent=1 // pred_check
      _
    $region19: #{smcl_forward.1} parent=1 // pred_check_branch
      %234 = sbr.rel (0) target = $region21
    $region20: #{smcl_forward.1} parent=1 // pred_region
      _
    $region21: #{smcl_forward.1} parent=1 // pred_fallthru
      _
    // Predicated region
    $region22: #{smcl_forward.1} parent=1 // pred_check
      _
    $region23: #{smcl_forward.1} parent=1 // pred_check_branch
      %236 = sbr.rel (0) target = $region25
    $region24: #{smcl_forward.1} parent=1 // pred_region
      _
    $region25: #{smcl_forward.1} parent=1 // pred_fallthru
      _
    %237 = vsyncpa [#allocation3], 1

</llo_original>
